<compile_context>
chip_gen: v7x
topology: tpu7x:2x2x1
jax: 0.10.0
libtpu: 0.0.40
codegen_flags: <defaults>
</compile_context>

<pallas_src>
import functools

import jax
import jax.numpy as jnp
from jax import lax
from jax.experimental import pallas as pl
from jax.experimental.pallas import tpu as pltpu


# ---------------------------------------------------------------------------
# Pallas kernel: stream (N, D) along D, accumulate per-split (N, N) partials.
# ---------------------------------------------------------------------------
def _diversity_kernel(layer_ref, out_ref, *, metric, n, d_layer, tk, ck,
                      num_k_blocks, kpersplit, nshift):
    s_idx = pl.program_id(0)          # K-split ("parallel": one per TensorCore)
    k_idx = pl.program_id(1)          # K-block within split ("arbitrary")

    @pl.when(k_idx == 0)
    def _init():
        out_ref[...] = jnp.zeros_like(out_ref)

    kb = s_idx * kpersplit + k_idx    # global K-block index
    nck = tk // ck                    # static
    needs_mask = (d_layer % tk) != 0  # static: only when the last block is ragged

    @pl.when(kb < num_k_blocks)       # skip the clamped duplicate trailing block
    def _accumulate():
        block_off = kb * tk
        if needs_mask:
            lane = lax.broadcasted_iota(jnp.int32, (n, ck), 1)   # hoisted once

        def load_chunk(c):
            off = pl.multiple_of(c * ck, ck)
            xc = layer_ref[:, pl.ds(off, ck)]
            if needs_mask:
                # Zero out-of-range lanes: zeros add 0 to the gram / |diff| sums.
                limit = d_layer - block_off - off
                xc = jnp.where(lane < limit, xc, jnp.zeros_like(xc))
            return xc

        if metric in ("l2", "cosine"):
            def body(c, acc):
                xc = load_chunk(c)
                return acc + lax.dot_general(
                    xc, xc,
                    dimension_numbers=(((1,), (1,)), ((), ())),
                    preferred_element_type=jnp.float32)
            acc = lax.fori_loop(0, nck, body,
                                jnp.zeros((n, n), jnp.float32))
            out_ref[...] += acc
        else:  # 'l1' — symmetric cyclic-shift accumulation
            def body(c, carry):
                xc = load_chunk(c)
                out = []
                for s in range(1, nshift + 1):
                    # rolled[j] = x[(j - s) % n]  ->  pair (j, (j - s) % n)
                    diff = jnp.abs(xc - jnp.roll(xc, s, axis=0))
                    out.append(carry[s - 1] +
                               jnp.sum(diff.astype(jnp.float32),
                                       axis=1, keepdims=True))
                return tuple(out)
            init = tuple(jnp.zeros((n, 1), jnp.float32) for _ in range(nshift))
            sums = lax.fori_loop(0, nck, body, init)
            for s in range(nshift):
                out_ref[:, s:s + 1] += sums[s]       # column s <- shift (s+1) sums


# ---------------------------------------------------------------------------
# Wrapper
# ---------------------------------------------------------------------------
def _ceil_to(x, m):
    return (x + m - 1) // m * m


def _vmem_capacity_bytes():
    try:
        info = pltpu.get_tpu_info()
        cap = getattr(info, "vmem_capacity_bytes", None)
        if cap:
            return int(cap)
    except Exception:
        pass
    return 64 * 1024 * 1024   # conservative (v7x-sized) fallback


def diversity_loss(noises, layer, metric="l2", y_input=None,
                   diversity_loss_type=None, *, target_block_bytes=4 << 20):
    if metric not in ("l1", "l2", "cosine"):
        raise ValueError(metric)

    n = layer.shape[0]
    layer2d = jnp.reshape(layer, (n, -1))                 # .view(n, -1); native dtype
    noise2d = jnp.reshape(noises, (n, -1)).astype(jnp.float32)
    d_layer = layer2d.shape[1]

    if n < 2:                                             # degenerate: all distances 0
        return jnp.exp(jnp.zeros((), jnp.float32))

    itemsize = jnp.dtype(layer2d.dtype).itemsize
    nshift = n // 2

    # ---- block-size / VMEM budgeting (generation-aware) --------------------
    vmem_cap = _vmem_capacity_bytes()                     # 128 MiB v5e/v6e, 64 MiB v7x
    vmem_budget = (vmem_cap * 3) // 4                     # ~96 / ~48 MiB usable
    fixed = 4 << 20                                       # temps + accs + Mosaic slack

    ck = min(2048, _ceil_to(d_layer, 128))                # lane sub-chunk (x128)
    tk_target = max(ck, (target_block_bytes // (n * itemsize)) // ck * ck)
    tk_cap = max(ck, ((vmem_budget - fixed) // (2 * n * itemsize)) // ck * ck)
    tk = min(tk_target, tk_cap, _ceil_to(d_layer, ck))    # multiple of ck (and 128)
    num_k_blocks = pl.cdiv(d_layer, tk)

    num_splits = 2 if num_k_blocks >= 2 else 1            # v7x: one split per TC
    kpersplit = pl.cdiv(num_k_blocks, num_splits)

    vmem_needed = (2 * n * tk * itemsize                  # double-buffered input block
                   + 8 * n * ck * 4                       # sub-chunk temps (masks/diffs)
                   + 8 * n * n * 4                        # resident (n, n) accumulators
                   + (2 << 20))                           # Mosaic internal scratch
    vmem_limit = int(min(vmem_budget, max(vmem_needed, 16 << 20)))

    flops = 3 * n * nshift * d_layer if metric == "l1" else 2 * n * n * d_layer
    cost = pl.CostEstimate(
        flops=flops, transcendentals=0,
        bytes_accessed=n * d_layer * itemsize + num_splits * n * n * 4)

    kernel = functools.partial(
        _diversity_kernel, metric=metric, n=n, d_layer=d_layer, tk=tk, ck=ck,
        num_k_blocks=num_k_blocks, kpersplit=kpersplit, nshift=nshift)

    def layer_map(s, k):    # clamp a possible duplicate trailing block (skipped in-kernel)
        return (0, jnp.minimum(s * kpersplit + k, num_k_blocks - 1))

    partials = pl.pallas_call(
        kernel,
        out_shape=jax.ShapeDtypeStruct((num_splits, n, n), jnp.float32),
        grid_spec=pltpu.PrefetchScalarGridSpec(
            num_scalar_prefetch=0,
            grid=(num_splits, kpersplit),
            in_specs=[pl.BlockSpec((n, tk), layer_map)],
            out_specs=pl.BlockSpec((None, n, n), lambda s, k: (s, 0, 0)),
        ),
        compiler_params=pltpu.CompilerParams(
            dimension_semantics=("parallel", "arbitrary"),
            vmem_limit_bytes=vmem_limit),
        cost_estimate=cost,
    )(layer2d)

    acc = jnp.sum(partials, axis=0)                       # (n, n) f32

    # ---- epilogue: tiny O(n^2) work in plain JAX ----------------------------
    if metric == "l2":
        diag = jnp.diagonal(acc)
        layer_dist = jnp.maximum(diag[None, :] + diag[:, None] - 2.0 * acc,
                                 0.0) / d_layer
    elif metric == "cosine":
        diag = jnp.diagonal(acc)
        nrm = jnp.maximum(jnp.sqrt(diag), 1e-8)
        layer_dist = 1.0 - acc / (nrm[None, :] * nrm[:, None])
    else:  # 'l1': rebuild the symmetric matrix from the cyclic-shift sums
        idx = jnp.arange(n)
        layer_dist = jnp.zeros((n, n), jnp.float32)
        for s in range(1, nshift + 1):
            v = acc[:, s - 1]                 # v[j] = sum_k |x_j[k] - x_{(j-s)%n}[k]|
            cols = (idx - s) % n
            layer_dist = layer_dist.at[idx, cols].set(v)
            layer_dist = layer_dist.at[cols, idx].set(v)
        layer_dist = layer_dist / d_layer

    t1 = noise2d[None, :, :]
    t2 = noise2d[:, None, :]
    noise_dist = jnp.mean((t1 - t2) ** 2, axis=2)

    if diversity_loss_type == "div2":
        y2d = jnp.reshape(y_input, (n, -1)).astype(jnp.float32)
        y_dist = jnp.mean(jnp.abs(y2d[None, :, :] - y2d[:, None, :]), axis=2)
        return jnp.exp(-jnp.mean(noise_dist * layer_dist * jnp.exp(y_dist)))
    return jnp.exp(-jnp.mean(noise_dist * layer_dist))


# ---------------------------------------------------------------------------
# Pure-JAX reference (mirrors the PyTorch broadcasting exactly)
# ---------------------------------------------------------------------------
def _ref_pairwise(x, how):
    t1 = x[None, :, :]          # tensor.expand((n, n, d)) -> [i, j] = x[j]
    t2 = x[:, None, :]          # tensor.unsqueeze(1)      -> [i, j] = x[i]
    if how == "l1":
        return jnp.mean(jnp.abs(t1 - t2), axis=2)
    if how == "l2":
        return jnp.mean((t1 - t2) ** 2, axis=2)
    if how == "cosine":
        eps = 1e-8
        num = jnp.sum(t1 * t2, axis=2)
        den = jnp.maximum(jnp.linalg.norm(t1, axis=2), eps) * \
              jnp.maximum(jnp.linalg.norm(t2, axis=2), eps)
        return 1.0 - num / den
    raise ValueError(how)


def diversity_loss_ref(noises, layer, metric="l2"):
    n = layer.shape[0]
    layer2d = jnp.reshape(layer, (n, -1)).astype(jnp.float32)
    noise2d = jnp.reshape(noises, (n, -1)).astype(jnp.float32)
    layer_dist = _ref_pairwise(layer2d, metric)
    noise_dist = _ref_pairwise(noise2d, "l2")
    return jnp.exp(-jnp.mean(noise_dist * layer_dist))


# ---------------------------------------------------------------------------
if __name__ == "__main__":
    key = jax.random.PRNGKey(0)
    k1, k2, k3, k4 = jax.random.split(key, 4)

    noises = jax.random.normal(k2, (8, 32), dtype=jnp.float32)        # (N, noise_dim)

    # Config 1: aligned feature map, single block (fast path).
    layer_a = jax.random.normal(k1, (8, 4, 16, 16), dtype=jnp.float32)   # D = 1024
    # Config 2: ragged D + multi-block + 2-way split + in-kernel lane masking
    # (force tiny blocks via target_block_bytes to exercise the machinery).
    layer_b = jax.random.normal(k3, (8, 5, 24, 24), dtype=jnp.float32)   # D = 2880
    # Config 3: odd block count -> duplicate-block clamp path.
    layer_c = jax.random.normal(k4, (8, 6, 32, 32), dtype=jnp.float32)   # D = 6144

    for metric in ("l2", "l1", "cosine"):
        out = jax.block_until_ready(diversity_loss(noises, layer_a, metric=metric))
        ref = diversity_loss_ref(noises, layer_a, metric=metric)
        assert jnp.allclose(out, ref, rtol=1e-4, atol=1e-5), (metric, float(out), float(ref))

        out = jax.block_until_ready(
            diversity_loss(noises, layer_b, metric=metric, target_block_bytes=64 * 1024))
        ref = diversity_loss_ref(noises, layer_b, metric=metric)
        assert jnp.allclose(out, ref, rtol=1e-4, atol=1e-5), (metric, float(out), float(ref))

    out = jax.block_until_ready(
        diversity_loss(noises, layer_c, metric="l2", target_block_bytes=64 * 1024))
    ref = diversity_loss_ref(noises, layer_c, metric="l2")
    assert jnp.allclose(out, ref, rtol=1e-4, atol=1e-5), ("l2-clamp", float(out), float(ref))

    print("KERNEL_OK")
</pallas_src>

<mosaic_0001>
module attributes {stable_mosaic.version = 11 : i64} {
  func.func @_diversity_kernel(%arg0: i32, %arg1: i32, %arg2: memref<8x1024xf32, #tpu.memory_space<vmem>>, %arg3: memref<1x8x8xf32, #tpu.memory_space<vmem>>) attributes {dimension_semantics = [#tpu.dimension_semantics<parallel>, #tpu.dimension_semantics<arbitrary>], iteration_bounds = array<i64: 1, 1>, scalar_prefetch = 0 : i64, scratch_operands = 0 : i64, tpu.core_type = #tpu.core_type<tc>, window_params = [{transform_indices = @transform_0, window_bounds = array<i64: 8, 1024>}, {transform_indices = @transform_1, window_bounds = array<i64: 1, 8, 8>}]} {
    %c0_i32 = arith.constant 0 : i32
    %0 = arith.cmpi eq, %arg1, %c0_i32 : i32
    %1 = arith.extui %0 : i1 to i32
    %c0_i32_0 = arith.constant 0 : i32
    %2 = arith.cmpi ne, %1, %c0_i32_0 : i32
    scf.if %2 {
      %cst = arith.constant 0.000000e+00 : f32
      %8 = vector.broadcast %cst : f32 to vector<8x8xf32>
      %c0 = arith.constant 0 : index
      %c0_3 = arith.constant 0 : index
      %c0_4 = arith.constant 0 : index
      %9 = vector.load %arg3[%c0, %c0_3, %c0_4] : memref<1x8x8xf32, #tpu.memory_space<vmem>>, vector<1x8x8xf32>
      %10 = vector.shape_cast %9 : vector<1x8x8xf32> to vector<8x8xf32>
      %11 = vector.shape_cast %8 : vector<8x8xf32> to vector<1x8x8xf32>
      tpu.vector_store %arg3[%c0, %c0_3, %c0_4], %11 {strides = array<i32>} : memref<1x8x8xf32, #tpu.memory_space<vmem>>, vector<1x8x8xf32>,
    } else {
    }
    %c1_i32 = arith.constant 1 : i32
    %3 = arith.muli %arg0, %c1_i32 : i32
    %4 = arith.addi %3, %arg1 : i32
    %c1_i32_1 = arith.constant 1 : i32
    %5 = arith.cmpi slt, %4, %c1_i32_1 : i32
    %6 = arith.extui %5 : i1 to i32
    %c0_i32_2 = arith.constant 0 : i32
    %7 = arith.cmpi ne, %6, %c0_i32_2 : i32
    scf.if %7 {
      %cst = arith.constant 0.000000e+00 : f32
      %8 = vector.broadcast %cst : f32 to vector<8x8xf32>
      %c0_i32_3 = arith.constant 0 : i32
      %c1024_i32 = arith.constant 1024 : i32
      %9 = arith.muli %c0_i32_3, %c1024_i32 : i32
      %10 = tpu.assume_multiple %9, 1024 : i32
      %c0 = arith.constant 0 : index
      %11 = arith.index_cast %10 : i32 to index
      %12 = vector.load %arg2[%c0, %11] : memref<8x1024xf32, #tpu.memory_space<vmem>>, vector<8x1024xf32>
      %cst_4 = arith.constant dense<0.000000e+00> : vector<8x8xf32>
      %13 = tpu.matmul %12, %12, %cst_4 {dimension_numbers = #tpu.dot_dimension_numbers<[1], [1], [0], [0], [0, 0, 1, 0], [], []>} : vector<8x1024xf32>, vector<8x1024xf32>, vector<8x8xf32> -> vector<8x8xf32>
      %14 = arith.addf %8, %13 : vector<8x8xf32>
      %c1_i32_5 = arith.constant 1 : i32
      %c0_6 = arith.constant 0 : index
      %c0_7 = arith.constant 0 : index
      %c0_8 = arith.constant 0 : index
      %15 = vector.load %arg3[%c0_6, %c0_7, %c0_8] : memref<1x8x8xf32, #tpu.memory_space<vmem>>, vector<1x8x8xf32>
      %16 = vector.shape_cast %15 : vector<1x8x8xf32> to vector<8x8xf32>
      %17 = arith.addf %16, %14 : vector<8x8xf32>
      %c0_9 = arith.constant 0 : index
      %c0_10 = arith.constant 0 : index
      %c0_11 = arith.constant 0 : index
      %18 = vector.load %arg3[%c0_9, %c0_10, %c0_11] : memref<1x8x8xf32, #tpu.memory_space<vmem>>, vector<1x8x8xf32>
      %19 = vector.shape_cast %18 : vector<1x8x8xf32> to vector<8x8xf32>
      %20 = vector.shape_cast %17 : vector<8x8xf32> to vector<1x8x8xf32>
      tpu.vector_store %arg3[%c0_9, %c0_10, %c0_11], %20 {strides = array<i32>} : memref<1x8x8xf32, #tpu.memory_space<vmem>>, vector<1x8x8xf32>,
    } else {
    }
    return
  }
  func.func @transform_0(%arg0: i32, %arg1: i32) -> (i32, i32) {
    %c1_i32 = arith.constant 1 : i32
    %0 = arith.muli %arg0, %c1_i32 : i32
    %1 = arith.addi %0, %arg1 : i32
    %c0_i32 = arith.constant 0 : i32
    %2 = arith.minsi %1, %c0_i32 : i32
    %c0_i32_0 = arith.constant 0 : i32
    %c0_i32_1 = arith.constant 0 : i32
    return %c0_i32_0, %2 : i32, i32
  }
  func.func @transform_1(%arg0: i32, %arg1: i32) -> (i32, i32, i32) {
    %c0_i32 = arith.constant 0 : i32
    %c0_i32_0 = arith.constant 0 : i32
    %c0_i32_1 = arith.constant 0 : i32
    return %arg0, %c0_i32, %c0_i32_0 : i32, i32, i32
  }
}

</mosaic_0001>

<llo_original>
// kernel: tpu_custom_call.1
$region0: #{tpu_custom_call.1}
  #allocation0 [shape = 'u32[]', space=smem, size = 0x4, offset = 0x4, fixed_abs, tag = 'smem constant byte address 0x4 - core index']
  #allocation1 [shape = 'u32[144,128]{1,0:T(1,128)}', space=vmem, size = 0x12000, scoped, tag = 'internal scratch']
  %s0 = inlined_call_operand.hbm [shape: f32[8,1024], index: 0, kind: input, shape index: {}]
  %s1 = inlined_call_operand.hbm [shape: f32[1,8,8], index: 1, kind: output, shape index: {}]
  %s2 = sld [smem:[#allocation0]]
  $region26: #{tpu_custom_call.1} parent=0
    _
  %s4 = ssub.s32 1, %s2
  %s5 = scalar_select 0, %s4, %s2
  $region1: #{tpu_custom_call.1} parent=0
    #allocation2 [shape = 'u8[32768]{0}', space=vmem, size = 0x8000, scoped, tag = 'input window, operand 0, single buffered']
    #allocation3 [shape = 's32[1]{0}', space=sflag, size = 0x4, scoped, tag = 'scoped memory for tpu_custom_call.1']
    #allocation4 [shape = 's32[1]{0}', space=sflag, size = 0x4, scoped, tag = 'scoped memory for tpu_custom_call.1']
    #allocation5 [shape = 'u8[4096]{0}', space=vmem, size = 0x1000, scoped, tag = 'output window, operand 0, single buffered']
    %6 = vsyncpa [#allocation3], 0
    %7 = vsyncpa [#allocation4], 0
    // Predicated region
    $region2: #{tpu_custom_call.1} parent=1 // pred_check
      _
    $region3: #{tpu_custom_call.1} parent=1 // pred_check_branch
      %9 = sbr.rel (0) target = $region5
    $region4: #{tpu_custom_call.1} parent=1 // pred_region
      %s10 = sadd.s32 0, 0
      %p11 = scmp.lt.s32.totalorder %s10, 0
      %s12 = scalar_select %p11, %s10, 0
      %s13 = smul.u32 8, %s12
      %s15 = ssub.s32 1024, 1024
      %16 = vsyncadd [#allocation3], %s15
      %s17 = smul.addr %s13, 128
      %s18 = scalar_lea.hbm %s0, %s17
      %s20 = sshll.u32 [#allocation2], 4
      %s21 = int_to_ptr.vmem [resolvable:$true] %s20
      %23 = dma.hbm_to_vmem [thread:$0]  %s18, 1024, %s21, [#allocation3]
    $region5: #{tpu_custom_call.1} parent=1 // pred_fallthru
      _
    // Predicated region
    $region6: #{tpu_custom_call.1} parent=1 // pred_check
      _
    $region7: #{tpu_custom_call.1} parent=1 // pred_check_branch
      %25 = sbr.rel (0) target = $region9
    $region8: #{tpu_custom_call.1} parent=1 // pred_region
      %26 = dma.done [#allocation3], 1024
    $region9: #{tpu_custom_call.1} parent=1 // pred_fallthru
      _
    %s27 = sadd.s32 0, 0
    %p28 = scmp.lt.s32.totalorder %s27, 0
    %s29 = scalar_select %p28, %s27, 0
    %s30 = smul.u32 8, %s29
    %p31 = scmp.eq.s32.totalorder 0, 0
    // Predicated region
    $region10: #{tpu_custom_call.1} parent=1 // pred_check
      %p32 = pneg %p31
    $region11: #{tpu_custom_call.1} parent=1 // pred_check_branch
      %34 = sbr.rel (%p32) target = $region13
    $region12: #{tpu_custom_call.1} parent=1 // pred_region
      %vm35 = vcmask 64512
      %36 = vst.msk [vmem:[#allocation5] sm:$0xff] %vm35, 0.0
    $region13: #{tpu_custom_call.1} parent=1 // pred_fallthru
      _
    %s37 = sadd.s32 0, 0
    %p38 = scmp.lt.s32.totalorder %s37, 1
    // Predicated region
    $region14: #{tpu_custom_call.1} parent=1 // pred_check
      %p39 = pneg %p38
    $region15: #{tpu_custom_call.1} parent=1 // pred_check_branch
      %41 = sbr.rel (%p39) target = $region17
    $region16: #{tpu_custom_call.1} parent=1 // pred_region
      %v42 = vld [vmem:[#allocation2] sm:$0xff]
      %v43 = vld [vmem:[#allocation2 + $0x8] sm:$0xff]
      %v44 = vld [vmem:[#allocation2 + $0x10] sm:$0xff]
      %v45 = vld [vmem:[#allocation2 + $0x18] sm:$0xff]
      %v46 = vld [vmem:[#allocation2 + $0x20] sm:$0xff]
      %v47 = vld [vmem:[#allocation2 + $0x28] sm:$0xff]
      %v48 = vld [vmem:[#allocation2 + $0x30] sm:$0xff]
      %v49 = vld [vmem:[#allocation2 + $0x38] sm:$0xff]
      %50 = vmatprep.subr.mxu0 %v43
      %51 = vmatpush1.xpose.msra.mxu0 %v42
      %52 = vmatprep.subr.mxu0 0.0
      %53 = vmatpush1.xpose.msra.mxu0 0.0
      %54 = vmatprep.subr.mxu0 0.0
      %55 = vmatpush1.xpose.msra.mxu0 0.0
      %56 = vmatprep.subr.mxu0 0.0
      %57 = vmatpush1.xpose.msra.mxu0 0.0
      %58 = vmatprep.subr.mxu0 0.0
      %59 = vmatpush1.xpose.msra.mxu0 0.0
      %60 = vmatprep.subr.mxu0 0.0
      %61 = vmatpush1.xpose.msra.mxu0 0.0
      %62 = vmatprep.subr.mxu0 0.0
      %63 = vmatpush1.xpose.msra.mxu0 0.0
      %64 = vmatprep.subr.mxu0 0.0
      %65 = vmatpush1.xpose.msra.mxu0 0.0
      %66 = vmatprep.subr.mxu0 0.0
      %67 = vmatpush1.xpose.msra.mxu0 0.0
      %68 = vmatprep.subr.mxu0 0.0
      %69 = vmatpush1.xpose.msra.mxu0 0.0
      %70 = vmatprep.subr.mxu0 0.0
      %71 = vmatpush1.xpose.msra.mxu0 0.0
      %72 = vmatprep.subr.mxu0 0.0
      %73 = vmatpush1.xpose.msra.mxu0 0.0
      %74 = vmatprep.subr.mxu0 0.0
      %75 = vmatpush1.xpose.msra.mxu0 0.0
      %76 = vmatprep.subr.mxu0 0.0
      %77 = vmatpush1.xpose.msra.mxu0 0.0
      %78 = vmatprep.subr.mxu0 0.0
      %79 = vmatpush1.xpose.msra.mxu0 0.0
      %80 = vmatprep.subr.mxu0 0.0
      %81 = vmatpush1.xpose.msra.mxu0 0.0
      %82 = vmatprep.subr.mxu0 0.0
      %83 = vmatpush1.xpose.msra.mxu0 0.0
      %84 = vmatprep.subr.mxu0 0.0
      %85 = vmatpush1.xpose.msra.mxu0 0.0
      %86 = vmatprep.subr.mxu0 0.0
      %87 = vmatpush1.xpose.msra.mxu0 0.0
      %88 = vmatprep.subr.mxu0 0.0
      %89 = vmatpush1.xpose.msra.mxu0 0.0
      %90 = vmatprep.subr.mxu0 0.0
      %91 = vmatpush1.xpose.msra.mxu0 0.0
      %92 = vmatprep.subr.mxu0 0.0
      %93 = vmatpush1.xpose.msra.mxu0 0.0
      %94 = vmatprep.subr.mxu0 0.0
      %95 = vmatpush1.xpose.msra.mxu0 0.0
      %96 = vmatprep.subr.mxu0 0.0
      %97 = vmatpush1.xpose.msra.mxu0 0.0
      %98 = vmatprep.subr.mxu0 0.0
      %99 = vmatpush1.xpose.msra.mxu0 0.0
      %100 = vmatprep.subr.mxu0 0.0
      %101 = vmatpush1.xpose.msra.mxu0 0.0
      %102 = vmatprep.subr.mxu0 0.0
      %103 = vmatpush1.xpose.msra.mxu0 0.0
      %104 = vmatprep.subr.mxu0 0.0
      %105 = vmatpush1.xpose.msra.mxu0 0.0
      %106 = vmatprep.subr.mxu0 0.0
      %107 = vmatpush1.xpose.msra.mxu0 0.0
      %108 = vmatprep.subr.mxu0 0.0
      %109 = vmatpush1.xpose.msra.mxu0 0.0
      %110 = vmatprep.subr.mxu0 0.0
      %111 = vmatpush1.xpose.msra.mxu0 0.0
      %112 = vmatprep.subr.mxu0 0.0
      %113 = vmatpush1.xpose.msra.mxu0 0.0
      %114 = vmatprep.mubr.f32.mxu0 %v43
      %115 = vmatmul.mubr.f32.gmra.mrb[0].mxu0 %v42
      %v116 = vpop.f32.mrb[0].mxu0
      %v117 = vadd.f32 0.0, %v116
      %v118 = vpop.f32.mrb[0].mxu0
      %119 = vdwg.mxu0
      %120 = vmatprep.subr.mxu0 %v45
      %121 = vmatpush1.xpose.msra.mxu0 %v44
      %122 = vmatprep.subr.mxu0 0.0
      %123 = vmatpush1.xpose.msra.mxu0 0.0
      %124 = vmatprep.subr.mxu0 0.0
      %125 = vmatpush1.xpose.msra.mxu0 0.0
      %126 = vmatprep.subr.mxu0 0.0
      %127 = vmatpush1.xpose.msra.mxu0 0.0
      %128 = vmatprep.subr.mxu0 0.0
      %129 = vmatpush1.xpose.msra.mxu0 0.0
      %130 = vmatprep.subr.mxu0 0.0
      %131 = vmatpush1.xpose.msra.mxu0 0.0
      %132 = vmatprep.subr.mxu0 0.0
      %133 = vmatpush1.xpose.msra.mxu0 0.0
      %134 = vmatprep.subr.mxu0 0.0
      %135 = vmatpush1.xpose.msra.mxu0 0.0
      %136 = vmatprep.subr.mxu0 0.0
      %137 = vmatpush1.xpose.msra.mxu0 0.0
      %138 = vmatprep.subr.mxu0 0.0
      %139 = vmatpush1.xpose.msra.mxu0 0.0
      %140 = vmatprep.subr.mxu0 0.0
      %141 = vmatpush1.xpose.msra.mxu0 0.0
      %142 = vmatprep.subr.mxu0 0.0
      %143 = vmatpush1.xpose.msra.mxu0 0.0
      %144 = vmatprep.subr.mxu0 0.0
      %145 = vmatpush1.xpose.msra.mxu0 0.0
      %146 = vmatprep.subr.mxu0 0.0
      %147 = vmatpush1.xpose.msra.mxu0 0.0
      %148 = vmatprep.subr.mxu0 0.0
      %149 = vmatpush1.xpose.msra.mxu0 0.0
      %150 = vmatprep.subr.mxu0 0.0
      %151 = vmatpush1.xpose.msra.mxu0 0.0
      %152 = vmatprep.subr.mxu0 0.0
      %153 = vmatpush1.xpose.msra.mxu0 0.0
      %154 = vmatprep.subr.mxu0 0.0
      %155 = vmatpush1.xpose.msra.mxu0 0.0
      %156 = vmatprep.subr.mxu0 0.0
      %157 = vmatpush1.xpose.msra.mxu0 0.0
      %158 = vmatprep.subr.mxu0 0.0
      %159 = vmatpush1.xpose.msra.mxu0 0.0
      %160 = vmatprep.subr.mxu0 0.0
      %161 = vmatpush1.xpose.msra.mxu0 0.0
      %162 = vmatprep.subr.mxu0 0.0
      %163 = vmatpush1.xpose.msra.mxu0 0.0
      %164 = vmatprep.subr.mxu0 0.0
      %165 = vmatpush1.xpose.msra.mxu0 0.0
      %166 = vmatprep.subr.mxu0 0.0
      %167 = vmatpush1.xpose.msra.mxu0 0.0
      %168 = vmatprep.subr.mxu0 0.0
      %169 = vmatpush1.xpose.msra.mxu0 0.0
      %170 = vmatprep.subr.mxu0 0.0
      %171 = vmatpush1.xpose.msra.mxu0 0.0
      %172 = vmatprep.subr.mxu0 0.0
      %173 = vmatpush1.xpose.msra.mxu0 0.0
      %174 = vmatprep.subr.mxu0 0.0
      %175 = vmatpush1.xpose.msra.mxu0 0.0
      %176 = vmatprep.subr.mxu0 0.0
      %177 = vmatpush1.xpose.msra.mxu0 0.0
      %178 = vmatprep.subr.mxu0 0.0
      %179 = vmatpush1.xpose.msra.mxu0 0.0
      %180 = vmatprep.subr.mxu0 0.0
      %181 = vmatpush1.xpose.msra.mxu0 0.0
      %182 = vmatprep.subr.mxu0 0.0
      %183 = vmatpush1.xpose.msra.mxu0 0.0
      %184 = vmatprep.mubr.f32.mxu0 %v45
      %185 = vmatmul.mubr.f32.gmra.mrb[0].mxu0 %v44
      %v186 = vpop.f32.mrb[0].mxu0
      %v187 = vadd.f32 %v117, %v186
      %v188 = vpop.f32.mrb[0].mxu0
      %189 = vdwg.mxu0
      %190 = vmatprep.subr.mxu0 %v47
      %191 = vmatpush1.xpose.msra.mxu0 %v46
      %192 = vmatprep.subr.mxu0 0.0
      %193 = vmatpush1.xpose.msra.mxu0 0.0
      %194 = vmatprep.subr.mxu0 0.0
      %195 = vmatpush1.xpose.msra.mxu0 0.0
      %196 = vmatprep.subr.mxu0 0.0
      %197 = vmatpush1.xpose.msra.mxu0 0.0
      %198 = vmatprep.subr.mxu0 0.0
      %199 = vmatpush1.xpose.msra.mxu0 0.0
      %200 = vmatprep.subr.mxu0 0.0
      %201 = vmatpush1.xpose.msra.mxu0 0.0
      %202 = vmatprep.subr.mxu0 0.0
      %203 = vmatpush1.xpose.msra.mxu0 0.0
      %204 = vmatprep.subr.mxu0 0.0
      %205 = vmatpush1.xpose.msra.mxu0 0.0
      %206 = vmatprep.subr.mxu0 0.0
      %207 = vmatpush1.xpose.msra.mxu0 0.0
      %208 = vmatprep.subr.mxu0 0.0
      %209 = vmatpush1.xpose.msra.mxu0 0.0
      %210 = vmatprep.subr.mxu0 0.0
      %211 = vmatpush1.xpose.msra.mxu0 0.0
      %212 = vmatprep.subr.mxu0 0.0
      %213 = vmatpush1.xpose.msra.mxu0 0.0
      %214 = vmatprep.subr.mxu0 0.0
      %215 = vmatpush1.xpose.msra.mxu0 0.0
      %216 = vmatprep.subr.mxu0 0.0
      %217 = vmatpush1.xpose.msra.mxu0 0.0
      %218 = vmatprep.subr.mxu0 0.0
      %219 = vmatpush1.xpose.msra.mxu0 0.0
      %220 = vmatprep.subr.mxu0 0.0
      %221 = vmatpush1.xpose.msra.mxu0 0.0
      %222 = vmatprep.subr.mxu0 0.0
      %223 = vmatpush1.xpose.msra.mxu0 0.0
      %224 = vmatprep.subr.mxu0 0.0
      %225 = vmatpush1.xpose.msra.mxu0 0.0
      %226 = vmatprep.subr.mxu0 0.0
      %227 = vmatpush1.xpose.msra.mxu0 0.0
      %228 = vmatprep.subr.mxu0 0.0
      %229 = vmatpush1.xpose.msra.mxu0 0.0
      %230 = vmatprep.subr.mxu0 0.0
      %231 = vmatpush1.xpose.msra.mxu0 0.0
      %232 = vmatprep.subr.mxu0 0.0
      %233 = vmatpush1.xpose.msra.mxu0 0.0
      %234 = vmatprep.subr.mxu0 0.0
      %235 = vmatpush1.xpose.msra.mxu0 0.0
      %236 = vmatprep.subr.mxu0 0.0
      %237 = vmatpush1.xpose.msra.mxu0 0.0
      %238 = vmatprep.subr.mxu0 0.0
      %239 = vmatpush1.xpose.msra.mxu0 0.0
      %240 = vmatprep.subr.mxu0 0.0
      %241 = vmatpush1.xpose.msra.mxu0 0.0
      %242 = vmatprep.subr.mxu0 0.0
      %243 = vmatpush1.xpose.msra.mxu0 0.0
      %244 = vmatprep.subr.mxu0 0.0
      %245 = vmatpush1.xpose.msra.mxu0 0.0
      %246 = vmatprep.subr.mxu0 0.0
      %247 = vmatpush1.xpose.msra.mxu0 0.0
      %248 = vmatprep.subr.mxu0 0.0
      %249 = vmatpush1.xpose.msra.mxu0 0.0
      %250 = vmatprep.subr.mxu0 0.0
      %251 = vmatpush1.xpose.msra.mxu0 0.0
      %252 = vmatprep.subr.mxu0 0.0
      %253 = vmatpush1.xpose.msra.mxu0 0.0
      %254 = vmatprep.mubr.f32.mxu0 %v47
      %255 = vmatmul.mubr.f32.gmra.mrb[0].mxu0 %v46
      %v256 = vpop.f32.mrb[0].mxu0
      %v257 = vadd.f32 %v187, %v256
      %v258 = vpop.f32.mrb[0].mxu0
      %259 = vdwg.mxu0
      %260 = vmatprep.subr.mxu0 %v49
      %261 = vmatpush1.xpose.msra.mxu0 %v48
      %262 = vmatprep.subr.mxu0 0.0
      %263 = vmatpush1.xpose.msra.mxu0 0.0
      %264 = vmatprep.subr.mxu0 0.0
      %265 = vmatpush1.xpose.msra.mxu0 0.0
      %266 = vmatprep.subr.mxu0 0.0
      %267 = vmatpush1.xpose.msra.mxu0 0.0
      %268 = vmatprep.subr.mxu0 0.0
      %269 = vmatpush1.xpose.msra.mxu0 0.0
      %270 = vmatprep.subr.mxu0 0.0
      %271 = vmatpush1.xpose.msra.mxu0 0.0
      %272 = vmatprep.subr.mxu0 0.0
      %273 = vmatpush1.xpose.msra.mxu0 0.0
      %274 = vmatprep.subr.mxu0 0.0
      %275 = vmatpush1.xpose.msra.mxu0 0.0
      %276 = vmatprep.subr.mxu0 0.0
      %277 = vmatpush1.xpose.msra.mxu0 0.0
      %278 = vmatprep.subr.mxu0 0.0
      %279 = vmatpush1.xpose.msra.mxu0 0.0
      %280 = vmatprep.subr.mxu0 0.0
      %281 = vmatpush1.xpose.msra.mxu0 0.0
      %282 = vmatprep.subr.mxu0 0.0
      %283 = vmatpush1.xpose.msra.mxu0 0.0
      %284 = vmatprep.subr.mxu0 0.0
      %285 = vmatpush1.xpose.msra.mxu0 0.0
      %286 = vmatprep.subr.mxu0 0.0
      %287 = vmatpush1.xpose.msra.mxu0 0.0
      %288 = vmatprep.subr.mxu0 0.0
      %289 = vmatpush1.xpose.msra.mxu0 0.0
      %290 = vmatprep.subr.mxu0 0.0
      %291 = vmatpush1.xpose.msra.mxu0 0.0
      %292 = vmatprep.subr.mxu0 0.0
      %293 = vmatpush1.xpose.msra.mxu0 0.0
      %294 = vmatprep.subr.mxu0 0.0
      %295 = vmatpush1.xpose.msra.mxu0 0.0
      %296 = vmatprep.subr.mxu0 0.0
      %297 = vmatpush1.xpose.msra.mxu0 0.0
      %298 = vmatprep.subr.mxu0 0.0
      %299 = vmatpush1.xpose.msra.mxu0 0.0
      %300 = vmatprep.subr.mxu0 0.0
      %301 = vmatpush1.xpose.msra.mxu0 0.0
      %302 = vmatprep.subr.mxu0 0.0
      %303 = vmatpush1.xpose.msra.mxu0 0.0
      %304 = vmatprep.subr.mxu0 0.0
      %305 = vmatpush1.xpose.msra.mxu0 0.0
      %306 = vmatprep.subr.mxu0 0.0
      %307 = vmatpush1.xpose.msra.mxu0 0.0
      %308 = vmatprep.subr.mxu0 0.0
      %309 = vmatpush1.xpose.msra.mxu0 0.0
      %310 = vmatprep.subr.mxu0 0.0
      %311 = vmatpush1.xpose.msra.mxu0 0.0
      %312 = vmatprep.subr.mxu0 0.0
      %313 = vmatpush1.xpose.msra.mxu0 0.0
      %314 = vmatprep.subr.mxu0 0.0
      %315 = vmatpush1.xpose.msra.mxu0 0.0
      %316 = vmatprep.subr.mxu0 0.0
      %317 = vmatpush1.xpose.msra.mxu0 0.0
      %318 = vmatprep.subr.mxu0 0.0
      %319 = vmatpush1.xpose.msra.mxu0 0.0
      %320 = vmatprep.subr.mxu0 0.0
      %321 = vmatpush1.xpose.msra.mxu0 0.0
      %322 = vmatprep.subr.mxu0 0.0
      %323 = vmatpush1.xpose.msra.mxu0 0.0
      %324 = vmatprep.mubr.f32.mxu0 %v49
      %325 = vmatmul.mubr.f32.gmra.mrb[0].mxu0 %v48
      %v326 = vpop.f32.mrb[0].mxu0
      %v327 = vadd.f32 %v257, %v326
      %v328 = vpop.f32.mrb[0].mxu0
      %329 = vdwg.mxu0
      %v330 = vld [vmem:[#allocation5] sm:$0xff]
      %v331 = vadd.f32 %v330, %v327
      %vm332 = vcmask 64512
      %333 = vst.msk [vmem:[#allocation5] sm:$0xff] %vm332, %v331
    $region17: #{tpu_custom_call.1} parent=1 // pred_fallthru
      _
    // Predicated region
    $region18: #{tpu_custom_call.1} parent=1 // pred_check
      _
    $region19: #{tpu_custom_call.1} parent=1 // pred_check_branch
      %335 = sbr.rel (0) target = $region21
    $region20: #{tpu_custom_call.1} parent=1 // pred_region
      %s337 = ssub.s32 128, 128
      %338 = vsyncadd [#allocation4], %s337
      %s340 = sshll.u32 [#allocation5], 4
      %s341 = int_to_ptr.vmem [resolvable:$true] %s340
      %343 = dma.vmem_to_hbm [thread:$0]  %s341, 128, %s1, [#allocation4]
    $region21: #{tpu_custom_call.1} parent=1 // pred_fallthru
      _
    // Predicated region
    $region22: #{tpu_custom_call.1} parent=1 // pred_check
      _
    $region23: #{tpu_custom_call.1} parent=1 // pred_check_branch
      %345 = sbr.rel (0) target = $region25
    $region24: #{tpu_custom_call.1} parent=1 // pred_region
      %346 = dma.done [#allocation4], 128
    $region25: #{tpu_custom_call.1} parent=1 // pred_fallthru
      _
    %347 = vsyncpa [#allocation3], 1
    %348 = vsyncpa [#allocation4], 1

</llo_original>
